<compile_context>
chip_gen: v7x
topology: tpu7x:2x2x1
jax: 0.10.0
libtpu: 0.0.40
codegen_flags: <defaults>
</compile_context>

<pallas_src>
import jax
import jax.numpy as jnp
import numpy as np
from jax.experimental import pallas as pl
from jax.experimental.pallas import tpu as pltpu


def nae_kernel(x1_ref, x2_ref, w1_ref, w2_ref, s_ref, o_ref, rs_ref, rb_ref,
               emb_ref, nrm_ref):
    # Activations arrive f32 straight from HBM; the bf16 cast is a free VPU op
    # (no extra wrapper-side XLA pass over B*C elements).
    e1 = jnp.dot(x1_ref[...].astype(jnp.bfloat16), w1_ref[...],
                 preferred_element_type=jnp.float32)          # (TM, d1)
    e2 = jnp.dot(x2_ref[...].astype(jnp.bfloat16), w2_ref[...],
                 preferred_element_type=jnp.float32)          # (TM, d2)

    # Lane-concat the two projector halves, then one fused epilogue over the
    # full (TM, DIM) width: folded Linear bias + eval-mode BatchNorm1d.
    e = jnp.concatenate([e1, e2], axis=1)                     # (TM, DIM)
    e = e * s_ref[...] + o_ref[...]

    # L2 normalization: one EUP rsqrt instead of sqrt + divide.
    sq = jnp.sum(e * e, axis=1, keepdims=True)                # (TM, 1)
    inv = jax.lax.rsqrt(jnp.maximum(sq, 1e-24))               # == 1/clamp(norm,1e-12)
    emb_ref[...] = e * inv                                    # single full-width store

    norms = sq * inv                                          # == sqrt(sq) (clamped)
    # rescaler BatchNorm1d(1) folded to scalar scale/offset, read from SMEM.
    nrm_ref[...] = norms * rs_ref[0, 0] + rb_ref[0, 0]


def _round_up(n, m):
    return ((n + m - 1) // m) * m


def prepare_nae_params(w1, b1, bn1, w2, b2, bn2, rescaler, eps=1e-5):
    """Fold biases + eval-mode BatchNorms and cast weights to bf16 ONCE
    (model-init time), so the per-call wrapper does no parameter work.

    w*: (C*, d*)  Linear weights, pre-transposed from torch's (d*, C*).
    b*: (d*,)     Linear biases.
    bn*: dict(gamma, beta, mean, var) for the per-projector BatchNorm1d(d*).
    rescaler: dict(gamma, beta, mean, var) for BatchNorm1d(1).
    """
    def fold(lin_b, bn):
        scale = bn["gamma"] / jnp.sqrt(bn["var"] + eps)
        offset = (lin_b - bn["mean"]) * scale + bn["beta"]
        return scale, offset

    s1, o1 = fold(b1, bn1)
    s2, o2 = fold(b2, bn2)
    s = jnp.concatenate([s1, s2])[None, :].astype(jnp.float32)   # (1, DIM)
    o = jnp.concatenate([o1, o2])[None, :].astype(jnp.float32)   # (1, DIM)

    r_scale = rescaler["gamma"] / jnp.sqrt(rescaler["var"] + eps)
    r_bias = rescaler["beta"] - rescaler["mean"] * r_scale
    return dict(
        w1=w1.astype(jnp.bfloat16),
        w2=w2.astype(jnp.bfloat16),
        s=s, o=o,
        r_scale=jnp.full((1, 1), r_scale, jnp.float32),
        r_bias=jnp.full((1, 1), r_bias, jnp.float32),
    )


def _nae_call(B_pad, TM, C1, d1, C2, d2, resident_kwargs):
    DIM = d1 + d2
    return pl.pallas_call(
        nae_kernel,
        grid=(B_pad // TM,),
        in_specs=[
            pl.BlockSpec((TM, C1), lambda i: (i, 0)),              # x1 tile (pipelined)
            pl.BlockSpec((TM, C2), lambda i: (i, 0)),              # x2 tile (pipelined)
            pl.BlockSpec((C1, d1), lambda i: (0, 0), **resident_kwargs),  # w1 bf16 (resident)
            pl.BlockSpec((C2, d2), lambda i: (0, 0), **resident_kwargs),  # w2 bf16 (resident)
            pl.BlockSpec((1, DIM), lambda i: (0, 0), **resident_kwargs),  # fused scale
            pl.BlockSpec((1, DIM), lambda i: (0, 0), **resident_kwargs),  # fused offset
            pl.BlockSpec(memory_space=pltpu.MemorySpace.SMEM),     # rescaler scale
            pl.BlockSpec(memory_space=pltpu.MemorySpace.SMEM),     # rescaler bias
        ],
        out_specs=(
            pl.BlockSpec((TM, DIM), lambda i: (i, 0)),
            pl.BlockSpec((TM, 1), lambda i: (i, 0)),
        ),
        out_shape=(
            jax.ShapeDtypeStruct((B_pad, DIM), jnp.float32),
            jax.ShapeDtypeStruct((B_pad, 1), jnp.float32),
        ),
        compiler_params=pltpu.CompilerParams(
            dimension_semantics=("parallel",),
            vmem_limit_bytes=32 * 1024 * 1024,
        ),
    )


def norm_aware_embedding(x1, x2, params):
    """Fused NormAwareEmbedding forward.

    x1: (B, C1), x2: (B, C2)  flattened 1x1 featmaps (f32, passed untouched).
    params: output of prepare_nae_params().
    Returns: embeddings (B, d1+d2) f32, rescaled norms (B,) f32.
    """
    B = x1.shape[0]
    C1, d1 = params["w1"].shape
    C2, d2 = params["w2"].shape

    # Batch tile: multiple of 16 sublanes (bf16 packing), capped at 512 rows
    # (VMEM budget on v5e/v7x), and chosen so the batch grid gets >= 2 steps
    # whenever B allows it (v7x shards the "parallel" axis over its 2 TCs).
    b16 = _round_up(B, 16)
    TM = min(512, max(16, _round_up(-(-b16 // 2), 16)))
    B_pad = _round_up(B, TM)
    if B_pad != B:
        pad = ((0, B_pad - B), (0, 0))
        x1 = jnp.pad(x1, pad)
        x2 = jnp.pad(x2, pad)

    args = (x1, x2, params["w1"], params["w2"], params["s"], params["o"],
            params["r_scale"], params["r_bias"])

    # Invariant operands (constant index_map) request a single buffer; fall
    # back to default double-buffering on jax versions without pipeline_mode.
    try:
        emb, nrm = _nae_call(B_pad, TM, C1, d1, C2, d2,
                             dict(pipeline_mode=pl.Buffered(1)))(*args)
    except Exception:
        emb, nrm = _nae_call(B_pad, TM, C1, d1, C2, d2, {})(*args)
    return emb[:B], nrm[:B, 0]


if __name__ == "__main__":
    key = jax.random.PRNGKey(0)
    # Small shapes consistent with the module: 2 featmaps, dim split evenly.
    B, C1, C2, DIM = 2, 64, 128, 32
    d1, d2 = DIM // 2, DIM // 2

    ks = jax.random.split(key, 6)
    # Inputs: NCHW featmaps with 1x1 spatial (as _flatten_fc_input expects).
    f1 = jax.random.normal(ks[0], (B, C1, 1, 1), jnp.float32)
    f2 = jax.random.normal(ks[1], (B, C2, 1, 1), jnp.float32)
    x1 = f1.reshape(B, C1)   # flatten(start_dim=1)
    x2 = f2.reshape(B, C2)

    # Deterministic parameter init mirroring __init__:
    #   Linear weight ~ N(0, 0.01), bias = 0
    #   BN weight ~ N(0, 0.01), bias = 0, running_mean = 0, running_var = 1
    #   rescaler BN(1): weight = 1, bias = 0, default running stats.
    w1 = 0.01 * jax.random.normal(ks[2], (C1, d1), jnp.float32)   # (in, out)
    w2 = 0.01 * jax.random.normal(ks[3], (C2, d2), jnp.float32)
    b1 = jnp.zeros((d1,), jnp.float32)
    b2 = jnp.zeros((d2,), jnp.float32)
    bn1 = dict(gamma=0.01 * jax.random.normal(ks[4], (d1,), jnp.float32),
               beta=jnp.zeros((d1,)), mean=jnp.zeros((d1,)), var=jnp.ones((d1,)))
    bn2 = dict(gamma=0.01 * jax.random.normal(ks[5], (d2,), jnp.float32),
               beta=jnp.zeros((d2,)), mean=jnp.zeros((d2,)), var=jnp.ones((d2,)))
    rescaler = dict(gamma=jnp.float32(1.0), beta=jnp.float32(0.0),
                    mean=jnp.float32(0.0), var=jnp.float32(1.0))

    # Parameters are folded / cast to bf16 exactly once (model-init time).
    params = prepare_nae_params(w1, b1, bn1, w2, b2, bn2, rescaler)

    emb, norms = norm_aware_embedding(x1, x2, params)
    jax.block_until_ready((emb, norms))

    # Pure-JAX reference (same bf16 matmul operands as the kernel, f32
    # accumulation and f32 epilogue).
    e1_ref = jnp.dot(x1.astype(jnp.bfloat16), params["w1"],
                     preferred_element_type=jnp.float32)
    e2_ref = jnp.dot(x2.astype(jnp.bfloat16), params["w2"],
                     preferred_element_type=jnp.float32)
    cat = jnp.concatenate([e1_ref, e2_ref], axis=1) * params["s"] + params["o"]
    n_ref = jnp.sqrt(jnp.sum(cat * cat, axis=1, keepdims=True))
    emb_ref = cat / jnp.maximum(n_ref, 1e-12)
    norms_ref = (n_ref * params["r_scale"] + params["r_bias"])[:, 0]

    assert emb.shape == (B, DIM) and norms.shape == (B,)
    np.testing.assert_allclose(np.asarray(emb), np.asarray(emb_ref),
                               rtol=1e-4, atol=1e-5)
    np.testing.assert_allclose(np.asarray(norms), np.asarray(norms_ref),
                               rtol=1e-4, atol=1e-5)
    print("KERNEL_OK")
</pallas_src>

<mosaic_0001>
module attributes {stable_mosaic.version = 11 : i64} {
  func.func @nae_kernel(%arg0: i32, %arg1: memref<16x64xf32, #tpu.memory_space<vmem>>, %arg2: memref<16x128xf32, #tpu.memory_space<vmem>>, %arg3: memref<64x16xbf16, #tpu.memory_space<vmem>>, %arg4: memref<128x16xbf16, #tpu.memory_space<vmem>>, %arg5: memref<1x32xf32, #tpu.memory_space<vmem>>, %arg6: memref<1x32xf32, #tpu.memory_space<vmem>>, %arg7: memref<1x1xf32, #tpu.memory_space<smem>>, %arg8: memref<1x1xf32, #tpu.memory_space<smem>>, %arg9: memref<16x32xf32, #tpu.memory_space<vmem>>, %arg10: memref<16x1xf32, #tpu.memory_space<vmem>>) attributes {dimension_semantics = [#tpu.dimension_semantics<parallel>], iteration_bounds = array<i64: 1>, scalar_prefetch = 0 : i64, scratch_operands = 0 : i64, tpu.core_type = #tpu.core_type<tc>, window_params = [{transform_indices = @transform_0, window_bounds = array<i64: 16, 64>}, {transform_indices = @transform_1, window_bounds = array<i64: 16, 128>}, {pipeline_mode = #tpu.pipeline_mode<synchronous>, transform_indices = @transform_2, window_bounds = array<i64: 64, 16>}, {pipeline_mode = #tpu.pipeline_mode<synchronous>, transform_indices = @transform_3, window_bounds = array<i64: 128, 16>}, {pipeline_mode = #tpu.pipeline_mode<synchronous>, transform_indices = @transform_4, window_bounds = array<i64: 1, 32>}, {pipeline_mode = #tpu.pipeline_mode<synchronous>, transform_indices = @transform_5, window_bounds = array<i64: 1, 32>}, {transform_indices = @transform_6, window_bounds = array<i64: 1, 1>}, {transform_indices = @transform_7, window_bounds = array<i64: 1, 1>}, {transform_indices = @transform_8, window_bounds = array<i64: 16, 32>}, {transform_indices = @transform_9, window_bounds = array<i64: 16, 1>}]} {
    %c0 = arith.constant 0 : index
    %c0_0 = arith.constant 0 : index
    %0 = vector.load %arg1[%c0, %c0_0] : memref<16x64xf32, #tpu.memory_space<vmem>>, vector<16x64xf32>
    %1 = arith.truncf %0 : vector<16x64xf32> to vector<16x64xbf16>
    %c0_1 = arith.constant 0 : index
    %c0_2 = arith.constant 0 : index
    %2 = vector.load %arg3[%c0_1, %c0_2] : memref<64x16xbf16, #tpu.memory_space<vmem>>, vector<64x16xbf16>
    %cst = arith.constant dense<0.000000e+00> : vector<16x16xf32>
    %3 = tpu.matmul %1, %2, %cst {dimension_numbers = #tpu.dot_dimension_numbers<[1], [0], [0], [1], [0, 0, 1, 1], [], []>} : vector<16x64xbf16>, vector<64x16xbf16>, vector<16x16xf32> -> vector<16x16xf32>
    %c0_3 = arith.constant 0 : index
    %c0_4 = arith.constant 0 : index
    %4 = vector.load %arg2[%c0_3, %c0_4] : memref<16x128xf32, #tpu.memory_space<vmem>>, vector<16x128xf32>
    %5 = arith.truncf %4 : vector<16x128xf32> to vector<16x128xbf16>
    %c0_5 = arith.constant 0 : index
    %c0_6 = arith.constant 0 : index
    %6 = vector.load %arg4[%c0_5, %c0_6] : memref<128x16xbf16, #tpu.memory_space<vmem>>, vector<128x16xbf16>
    %cst_7 = arith.constant dense<0.000000e+00> : vector<16x16xf32>
    %7 = tpu.matmul %5, %6, %cst_7 {dimension_numbers = #tpu.dot_dimension_numbers<[1], [0], [0], [1], [0, 0, 1, 1], [], []>} : vector<16x128xbf16>, vector<128x16xbf16>, vector<16x16xf32> -> vector<16x16xf32>
    %8 = tpu.concatenate %3, %7 in 1 : vector<16x16xf32>, vector<16x16xf32> -> vector<16x32xf32>
    %c0_8 = arith.constant 0 : index
    %c0_9 = arith.constant 0 : index
    %9 = vector.load %arg5[%c0_8, %c0_9] : memref<1x32xf32, #tpu.memory_space<vmem>>, vector<1x32xf32>
    %10 = vector.broadcast %9 : vector<1x32xf32> to vector<16x32xf32>
    %11 = arith.mulf %8, %10 : vector<16x32xf32>
    %c0_10 = arith.constant 0 : index
    %c0_11 = arith.constant 0 : index
    %12 = vector.load %arg6[%c0_10, %c0_11] : memref<1x32xf32, #tpu.memory_space<vmem>>, vector<1x32xf32>
    %13 = vector.broadcast %12 : vector<1x32xf32> to vector<16x32xf32>
    %14 = arith.addf %11, %13 : vector<16x32xf32>
    %15 = arith.mulf %14, %14 : vector<16x32xf32>
    %cst_12 = arith.constant dense<0.000000e+00> : vector<16xf32>
    %16 = vector.multi_reduction <add>, %15, %cst_12 [1] : vector<16x32xf32> to vector<16xf32>
    %17 = vector.shape_cast %16 : vector<16xf32> to vector<16x1xf32>
    %cst_13 = arith.constant 1.000000e-24 : f32
    %18 = vector.broadcast %cst_13 : f32 to vector<16x1xf32>
    %19 = arith.maximumf %17, %18 : vector<16x1xf32>
    %20 = math.rsqrt %19 : vector<16x1xf32>
    %21 = vector.broadcast %20 : vector<16x1xf32> to vector<16x32xf32>
    %22 = arith.mulf %14, %21 : vector<16x32xf32>
    %c0_14 = arith.constant 0 : index
    %c0_15 = arith.constant 0 : index
    %23 = vector.load %arg9[%c0_14, %c0_15] : memref<16x32xf32, #tpu.memory_space<vmem>>, vector<16x32xf32>
    tpu.vector_store %arg9[%c0_14, %c0_15], %22 {strides = array<i32>} : memref<16x32xf32, #tpu.memory_space<vmem>>, vector<16x32xf32>,
    %24 = arith.mulf %17, %20 : vector<16x1xf32>
    %c0_16 = arith.constant 0 : index
    %c0_17 = arith.constant 0 : index
    %25 = memref.load %arg7[%c0_16, %c0_17] : memref<1x1xf32, #tpu.memory_space<smem>>
    %26 = vector.broadcast %25 : f32 to vector<16x1xf32>
    %27 = arith.mulf %24, %26 : vector<16x1xf32>
    %c0_18 = arith.constant 0 : index
    %c0_19 = arith.constant 0 : index
    %28 = memref.load %arg8[%c0_18, %c0_19] : memref<1x1xf32, #tpu.memory_space<smem>>
    %29 = vector.broadcast %28 : f32 to vector<16x1xf32>
    %30 = arith.addf %27, %29 : vector<16x1xf32>
    %c0_20 = arith.constant 0 : index
    %c0_21 = arith.constant 0 : index
    %31 = vector.load %arg10[%c0_20, %c0_21] : memref<16x1xf32, #tpu.memory_space<vmem>>, vector<16x1xf32>
    tpu.vector_store %arg10[%c0_20, %c0_21], %30 {strides = array<i32>} : memref<16x1xf32, #tpu.memory_space<vmem>>, vector<16x1xf32>,
    return
  }
  func.func @transform_0(%arg0: i32) -> (i32, i32) {
    %c0_i32 = arith.constant 0 : i32
    %c0_i32_0 = arith.constant 0 : i32
    return %arg0, %c0_i32 : i32, i32
  }
  func.func @transform_1(%arg0: i32) -> (i32, i32) {
    %c0_i32 = arith.constant 0 : i32
    %c0_i32_0 = arith.constant 0 : i32
    return %arg0, %c0_i32 : i32, i32
  }
  func.func @transform_2(%arg0: i32) -> (i32, i32) {
    %c0_i32 = arith.constant 0 : i32
    %c0_i32_0 = arith.constant 0 : i32
    %c0_i32_1 = arith.constant 0 : i32
    return %c0_i32, %c0_i32_0 : i32, i32
  }
  func.func @transform_3(%arg0: i32) -> (i32, i32) {
    %c0_i32 = arith.constant 0 : i32
    %c0_i32_0 = arith.constant 0 : i32
    %c0_i32_1 = arith.constant 0 : i32
    return %c0_i32, %c0_i32_0 : i32, i32
  }
  func.func @transform_4(%arg0: i32) -> (i32, i32) {
    %c0_i32 = arith.constant 0 : i32
    %c0_i32_0 = arith.constant 0 : i32
    %c0_i32_1 = arith.constant 0 : i32
    return %c0_i32, %c0_i32_0 : i32, i32
  }
  func.func @transform_5(%arg0: i32) -> (i32, i32) {
    %c0_i32 = arith.constant 0 : i32
    %c0_i32_0 = arith.constant 0 : i32
    %c0_i32_1 = arith.constant 0 : i32
    return %c0_i32, %c0_i32_0 : i32, i32
  }
  func.func @transform_6(%arg0: i32) -> (i32, i32) {
    %c0_i32 = arith.constant 0 : i32
    %c0_i32_0 = arith.constant 0 : i32
    %c0_i32_1 = arith.constant 0 : i32
    return %c0_i32, %c0_i32_0 : i32, i32
  }
  func.func @transform_7(%arg0: i32) -> (i32, i32) {
    %c0_i32 = arith.constant 0 : i32
    %c0_i32_0 = arith.constant 0 : i32
    %c0_i32_1 = arith.constant 0 : i32
    return %c0_i32, %c0_i32_0 : i32, i32
  }
  func.func @transform_8(%arg0: i32) -> (i32, i32) {
    %c0_i32 = arith.constant 0 : i32
    %c0_i32_0 = arith.constant 0 : i32
    return %arg0, %c0_i32 : i32, i32
  }
  func.func @transform_9(%arg0: i32) -> (i32, i32) {
    %c0_i32 = arith.constant 0 : i32
    %c0_i32_0 = arith.constant 0 : i32
    return %arg0, %c0_i32 : i32, i32
  }
}

module attributes {stable_mosaic.version = 11 : i64} {
  func.func @nae_kernel(%arg0: i32, %arg1: memref<16x64xf32, #tpu.memory_space<vmem>>, %arg2: memref<16x128xf32, #tpu.memory_space<vmem>>, %arg3: memref<64x16xbf16, #tpu.memory_space<vmem>>, %arg4: memref<128x16xbf16, #tpu.memory_space<vmem>>, %arg5: memref<1x32xf32, #tpu.memory_space<vmem>>, %arg6: memref<1x32xf32, #tpu.memory_space<vmem>>, %arg7: memref<1x1xf32, #tpu.memory_space<smem>>, %arg8: memref<1x1xf32, #tpu.memory_space<smem>>, %arg9: memref<16x32xf32, #tpu.memory_space<vmem>>, %arg10: memref<16x1xf32, #tpu.memory_space<vmem>>) attributes {dimension_semantics = [#tpu.dimension_semantics<parallel>], iteration_bounds = array<i64: 1>, scalar_prefetch = 0 : i64, scratch_operands = 0 : i64, tpu.core_type = #tpu.core_type<tc>, window_params = [{transform_indices = @transform_0, window_bounds = array<i64: 16, 64>}, {transform_indices = @transform_1, window_bounds = array<i64: 16, 128>}, {pipeline_mode = #tpu.pipeline_mode<synchronous>, transform_indices = @transform_2, window_bounds = array<i64: 64, 16>}, {pipeline_mode = #tpu.pipeline_mode<synchronous>, transform_indices = @transform_3, window_bounds = array<i64: 128, 16>}, {pipeline_mode = #tpu.pipeline_mode<synchronous>, transform_indices = @transform_4, window_bounds = array<i64: 1, 32>}, {pipeline_mode = #tpu.pipeline_mode<synchronous>, transform_indices = @transform_5, window_bounds = array<i64: 1, 32>}, {transform_indices = @transform_6, window_bounds = array<i64: 1, 1>}, {transform_indices = @transform_7, window_bounds = array<i64: 1, 1>}, {transform_indices = @transform_8, window_bounds = array<i64: 16, 32>}, {transform_indices = @transform_9, window_bounds = array<i64: 16, 1>}]} {
    %c0 = arith.constant 0 : index
    %c0_0 = arith.constant 0 : index
    %0 = vector.load %arg1[%c0, %c0_0] : memref<16x64xf32, #tpu.memory_space<vmem>>, vector<16x64xf32>
    %1 = arith.truncf %0 : vector<16x64xf32> to vector<16x64xbf16>
    %c0_1 = arith.constant 0 : index
    %c0_2 = arith.constant 0 : index
    %2 = vector.load %arg3[%c0_1, %c0_2] : memref<64x16xbf16, #tpu.memory_space<vmem>>, vector<64x16xbf16>
    %cst = arith.constant dense<0.000000e+00> : vector<16x16xf32>
    %3 = tpu.matmul %1, %2, %cst {dimension_numbers = #tpu.dot_dimension_numbers<[1], [0], [0], [1], [0, 0, 1, 1], [], []>} : vector<16x64xbf16>, vector<64x16xbf16>, vector<16x16xf32> -> vector<16x16xf32>
    %c0_3 = arith.constant 0 : index
    %c0_4 = arith.constant 0 : index
    %4 = vector.load %arg2[%c0_3, %c0_4] : memref<16x128xf32, #tpu.memory_space<vmem>>, vector<16x128xf32>
    %5 = arith.truncf %4 : vector<16x128xf32> to vector<16x128xbf16>
    %c0_5 = arith.constant 0 : index
    %c0_6 = arith.constant 0 : index
    %6 = vector.load %arg4[%c0_5, %c0_6] : memref<128x16xbf16, #tpu.memory_space<vmem>>, vector<128x16xbf16>
    %cst_7 = arith.constant dense<0.000000e+00> : vector<16x16xf32>
    %7 = tpu.matmul %5, %6, %cst_7 {dimension_numbers = #tpu.dot_dimension_numbers<[1], [0], [0], [1], [0, 0, 1, 1], [], []>} : vector<16x128xbf16>, vector<128x16xbf16>, vector<16x16xf32> -> vector<16x16xf32>
    %8 = tpu.concatenate %3, %7 in 1 : vector<16x16xf32>, vector<16x16xf32> -> vector<16x32xf32>
    %c0_8 = arith.constant 0 : index
    %c0_9 = arith.constant 0 : index
    %9 = vector.load %arg5[%c0_8, %c0_9] : memref<1x32xf32, #tpu.memory_space<vmem>>, vector<1x32xf32>
    %10 = vector.broadcast %9 : vector<1x32xf32> to vector<16x32xf32>
    %11 = arith.mulf %8, %10 : vector<16x32xf32>
    %c0_10 = arith.constant 0 : index
    %c0_11 = arith.constant 0 : index
    %12 = vector.load %arg6[%c0_10, %c0_11] : memref<1x32xf32, #tpu.memory_space<vmem>>, vector<1x32xf32>
    %13 = vector.broadcast %12 : vector<1x32xf32> to vector<16x32xf32>
    %14 = arith.addf %11, %13 : vector<16x32xf32>
    %15 = arith.mulf %14, %14 : vector<16x32xf32>
    %cst_12 = arith.constant dense<0.000000e+00> : vector<16xf32>
    %16 = vector.multi_reduction <add>, %15, %cst_12 [1] : vector<16x32xf32> to vector<16xf32>
    %17 = vector.shape_cast %16 : vector<16xf32> to vector<16x1xf32>
    %cst_13 = arith.constant 1.000000e-24 : f32
    %18 = vector.broadcast %cst_13 : f32 to vector<16x1xf32>
    %19 = arith.maximumf %17, %18 : vector<16x1xf32>
    %20 = math.rsqrt %19 : vector<16x1xf32>
    %21 = vector.broadcast %20 : vector<16x1xf32> to vector<16x32xf32>
    %22 = arith.mulf %14, %21 : vector<16x32xf32>
    %c0_14 = arith.constant 0 : index
    %c0_15 = arith.constant 0 : index
    %23 = vector.load %arg9[%c0_14, %c0_15] : memref<16x32xf32, #tpu.memory_space<vmem>>, vector<16x32xf32>
    tpu.vector_store %arg9[%c0_14, %c0_15], %22 {strides = array<i32>} : memref<16x32xf32, #tpu.memory_space<vmem>>, vector<16x32xf32>,
    %24 = arith.mulf %17, %20 : vector<16x1xf32>
    %c0_16 = arith.constant 0 : index
    %c0_17 = arith.constant 0 : index
    %25 = memref.load %arg7[%c0_16, %c0_17] : memref<1x1xf32, #tpu.memory_space<smem>>
    %26 = vector.broadcast %25 : f32 to vector<16x1xf32>
    %27 = arith.mulf %24, %26 : vector<16x1xf32>
    %c0_18 = arith.constant 0 : index
    %c0_19 = arith.constant 0 : index
    %28 = memref.load %arg8[%c0_18, %c0_19] : memref<1x1xf32, #tpu.memory_space<smem>>
    %29 = vector.broadcast %28 : f32 to vector<16x1xf32>
    %30 = arith.addf %27, %29 : vector<16x1xf32>
    %c0_20 = arith.constant 0 : index
    %c0_21 = arith.constant 0 : index
    %31 = vector.load %arg10[%c0_20, %c0_21] : memref<16x1xf32, #tpu.memory_space<vmem>>, vector<16x1xf32>
    tpu.vector_store %arg10[%c0_20, %c0_21], %30 {strides = array<i32>} : memref<16x1xf32, #tpu.memory_space<vmem>>, vector<16x1xf32>,
    return
  }
  func.func @transform_0(%arg0: i32) -> (i32, i32) {
    %c0_i32 = arith.constant 0 : i32
    %c0_i32_0 = arith.constant 0 : i32
    return %arg0, %c0_i32 : i32, i32
  }
  func.func @transform_1(%arg0: i32) -> (i32, i32) {
    %c0_i32 = arith.constant 0 : i32
    %c0_i32_0 = arith.constant 0 : i32
    return %arg0, %c0_i32 : i32, i32
  }
  func.func @transform_2(%arg0: i32) -> (i32, i32) {
    %c0_i32 = arith.constant 0 : i32
    %c0_i32_0 = arith.constant 0 : i32
    %c0_i32_1 = arith.constant 0 : i32
    return %c0_i32, %c0_i32_0 : i32, i32
  }
  func.func @transform_3(%arg0: i32) -> (i32, i32) {
    %c0_i32 = arith.constant 0 : i32
    %c0_i32_0 = arith.constant 0 : i32
    %c0_i32_1 = arith.constant 0 : i32
    return %c0_i32, %c0_i32_0 : i32, i32
  }
  func.func @transform_4(%arg0: i32) -> (i32, i32) {
    %c0_i32 = arith.constant 0 : i32
    %c0_i32_0 = arith.constant 0 : i32
    %c0_i32_1 = arith.constant 0 : i32
    return %c0_i32, %c0_i32_0 : i32, i32
  }
  func.func @transform_5(%arg0: i32) -> (i32, i32) {
    %c0_i32 = arith.constant 0 : i32
    %c0_i32_0 = arith.constant 0 : i32
    %c0_i32_1 = arith.constant 0 : i32
    return %c0_i32, %c0_i32_0 : i32, i32
  }
  func.func @transform_6(%arg0: i32) -> (i32, i32) {
    %c0_i32 = arith.constant 0 : i32
    %c0_i32_0 = arith.constant 0 : i32
    %c0_i32_1 = arith.constant 0 : i32
    return %c0_i32, %c0_i32_0 : i32, i32
  }
  func.func @transform_7(%arg0: i32) -> (i32, i32) {
    %c0_i32 = arith.constant 0 : i32
    %c0_i32_0 = arith.constant 0 : i32
    %c0_i32_1 = arith.constant 0 : i32
    return %c0_i32, %c0_i32_0 : i32, i32
  }
  func.func @transform_8(%arg0: i32) -> (i32, i32) {
    %c0_i32 = arith.constant 0 : i32
    %c0_i32_0 = arith.constant 0 : i32
    return %arg0, %c0_i32 : i32, i32
  }
  func.func @transform_9(%arg0: i32) -> (i32, i32) {
    %c0_i32 = arith.constant 0 : i32
    %c0_i32_0 = arith.constant 0 : i32
    return %arg0, %c0_i32 : i32, i32
  }
}

</mosaic_0001>

<llo_original>
// kernel: tpu_custom_call.1
$region0: #{tpu_custom_call.1}
  #allocation0 [shape = 'u32[]', space=smem, size = 0x4, offset = 0x4, fixed_abs, tag = 'smem constant byte address 0x4 - core index']
  #allocation1 [shape = 'u32[144,128]{1,0:T(1,128)}', space=vmem, size = 0x12000, scoped, tag = 'internal scratch']
  #allocation2 [shape = 'f32[1,1]{1,0:T(1,128)S(6)}', space=smem, size = 0x200, scoped, tag = 'scoped memory for tpu_custom_call.1']
  #allocation3 [shape = 'f32[1,1]{1,0:T(1,128)S(6)}', space=smem, size = 0x200, scoped, tag = 'scoped memory for tpu_custom_call.1']
  %s0 = inlined_call_operand.vmem [shape: f32[16,64], index: 0, kind: input, shape index: {}]
  %s1 = inlined_call_operand.vmem [shape: f32[16,128], index: 1, kind: input, shape index: {}]
  %s2 = inlined_call_operand.vmem [shape: bf16[64,16], index: 2, kind: input, shape index: {}]
  %s3 = inlined_call_operand.vmem [shape: bf16[128,16], index: 3, kind: input, shape index: {}]
  %s4 = inlined_call_operand.vmem [shape: f32[1,32], index: 4, kind: input, shape index: {}]
  %s5 = inlined_call_operand.vmem [shape: f32[1,32], index: 5, kind: input, shape index: {}]
  %s6 = inlined_call_operand.<no memory space> [shape: f32[1,1], index: 6, kind: input, shape index: {}]
  %s7 = inlined_call_operand.<no memory space> [shape: f32[1,1], index: 7, kind: input, shape index: {}]
  %s8 = inlined_call_operand.hbm [shape: f32[16,32], index: 8, kind: output, shape index: {0}]
  %s9 = inlined_call_operand.vmem [shape: f32[16,1], index: 9, kind: output, shape index: {1}]
  %10 = xla_tuple %s8, %s9
  %s11 = sld [smem:[#allocation0]]
  $region50: #{tpu_custom_call.1} parent=0
    _
  %s13 = ssub.s32 1, %s11
  %s14 = scalar_select 0, %s13, %s11
  %15 = sst [smem:[#allocation2]] %s6
  %16 = sst [smem:[#allocation3]] %s7
  $region1: #{tpu_custom_call.1} parent=0
    #allocation4 [shape = 'u8[8192]{0}', space=vmem, size = 0x2000, scoped, tag = 'output window, operand 0, single buffered']
    #allocation5 [shape = 's32[1]{0}', space=sflag, size = 0x4, scoped, tag = 'scoped memory for tpu_custom_call.1']
    %17 = vsyncpa [#allocation5], 0
    // Predicated region
    $region2: #{tpu_custom_call.1} parent=1 // pred_check
      _
    $region3: #{tpu_custom_call.1} parent=1 // pred_check_branch
      %19 = sbr.rel (0) target = $region5
    $region4: #{tpu_custom_call.1} parent=1 // pred_region
      _
    $region5: #{tpu_custom_call.1} parent=1 // pred_fallthru
      _
    // Predicated region
    $region6: #{tpu_custom_call.1} parent=1 // pred_check
      _
    $region7: #{tpu_custom_call.1} parent=1 // pred_check_branch
      %21 = sbr.rel (0) target = $region9
    $region8: #{tpu_custom_call.1} parent=1 // pred_region
      _
    $region9: #{tpu_custom_call.1} parent=1 // pred_fallthru
      _
    // Predicated region
    $region10: #{tpu_custom_call.1} parent=1 // pred_check
      _
    $region11: #{tpu_custom_call.1} parent=1 // pred_check_branch
      %23 = sbr.rel (0) target = $region13
    $region12: #{tpu_custom_call.1} parent=1 // pred_region
      _
    $region13: #{tpu_custom_call.1} parent=1 // pred_fallthru
      _
    // Predicated region
    $region14: #{tpu_custom_call.1} parent=1 // pred_check
      _
    $region15: #{tpu_custom_call.1} parent=1 // pred_check_branch
      %25 = sbr.rel (0) target = $region17
    $region16: #{tpu_custom_call.1} parent=1 // pred_region
      _
    $region17: #{tpu_custom_call.1} parent=1 // pred_fallthru
      _
    // Predicated region
    $region18: #{tpu_custom_call.1} parent=1 // pred_check
      _
    $region19: #{tpu_custom_call.1} parent=1 // pred_check_branch
      %27 = sbr.rel (0) target = $region21
    $region20: #{tpu_custom_call.1} parent=1 // pred_region
      _
    $region21: #{tpu_custom_call.1} parent=1 // pred_fallthru
      _
    // Predicated region
    $region22: #{tpu_custom_call.1} parent=1 // pred_check
      _
    $region23: #{tpu_custom_call.1} parent=1 // pred_check_branch
      %29 = sbr.rel (0) target = $region25
    $region24: #{tpu_custom_call.1} parent=1 // pred_region
      _
    $region25: #{tpu_custom_call.1} parent=1 // pred_fallthru
      _
    // Predicated region
    $region26: #{tpu_custom_call.1} parent=1 // pred_check
      _
    $region27: #{tpu_custom_call.1} parent=1 // pred_check_branch
      %31 = sbr.rel (0) target = $region29
    $region28: #{tpu_custom_call.1} parent=1 // pred_region
      _
    $region29: #{tpu_custom_call.1} parent=1 // pred_fallthru
      _
    // Predicated region
    $region30: #{tpu_custom_call.1} parent=1 // pred_check
      _
    $region31: #{tpu_custom_call.1} parent=1 // pred_check_branch
      %33 = sbr.rel (0) target = $region33
    $region32: #{tpu_custom_call.1} parent=1 // pred_region
      _
    $region33: #{tpu_custom_call.1} parent=1 // pred_fallthru
      _
    %v35 = vld [vmem:[%s0] sm:$0xff]
    %v36 = vld [vmem:[%s0 + $0x8] sm:$0xff]
    %v37 = vpack.c.bf16 %v36, %v35
    %v38 = vld [vmem:[%s2] sm:$0xf]
    %v39 = vld [vmem:[%s2 + $0x4] sm:$0xf]
    %v40 = vld [vmem:[%s2 + $0x8] sm:$0xf]
    %v41 = vld [vmem:[%s2 + $0xc] sm:$0xf]
    %v42 = vld [vmem:[%s2 + $0x10] sm:$0xf]
    %v43 = vld [vmem:[%s2 + $0x14] sm:$0xf]
    %v44 = vld [vmem:[%s2 + $0x18] sm:$0xf]
    %v45 = vld [vmem:[%s2 + $0x1c] sm:$0xf]
    %v54 = vunpack.c.l.b16 %v38
    %v55 = vunpack.c.l.b16 %v39
    %v56 = vunpack.c.l.b16 %v40
    %v57 = vunpack.c.l.b16 %v41
    %v58 = vunpack.c.l.b16 %v42
    %v59 = vunpack.c.l.b16 %v43
    %v60 = vunpack.c.l.b16 %v44
    %v61 = vunpack.c.l.b16 %v45
    %v62 = vpack.c.b16 %v55, %v54
    %v63 = vpack.c.b16 %v57, %v56
    %v64 = vpack.c.b16 %v59, %v58
    %v65 = vpack.c.b16 %v61, %v60
    %vm70 = vcmask 523264
    %v72 = vsel %vm70, %v37, 0
    %74 = vmatprep.subr.bf16.mxu0 0
    %75 = vmatpush1.bf16.msra.mxu0 %v62
    %76 = vmatprep.subr.bf16.mxu0 0
    %77 = vmatpush1.bf16.msra.mxu0 %v63
    %78 = vmatprep.subr.bf16.mxu0 0
    %79 = vmatpush1.bf16.msra.mxu0 %v64
    %80 = vmatprep.subr.bf16.mxu0 0
    %81 = vmatpush1.bf16.msra.mxu0 %v65
    %82 = vmatprep.subr.bf16.mxu0 0
    %83 = vmatpush1.bf16.msra.mxu0 0
    %84 = vmatprep.subr.bf16.mxu0 0
    %85 = vmatpush1.bf16.msra.mxu0 0
    %86 = vmatprep.subr.bf16.mxu0 0
    %87 = vmatpush1.bf16.msra.mxu0 0
    %88 = vmatprep.subr.bf16.mxu0 0
    %89 = vmatpush1.bf16.msra.mxu0 0
    %90 = vmatprep.subr.bf16.mxu0 0
    %91 = vmatpush1.bf16.msra.mxu0 0
    %92 = vmatprep.subr.bf16.mxu0 0
    %93 = vmatpush1.bf16.msra.mxu0 0
    %94 = vmatprep.subr.bf16.mxu0 0
    %95 = vmatpush1.bf16.msra.mxu0 0
    %96 = vmatprep.subr.bf16.mxu0 0
    %97 = vmatpush1.bf16.msra.mxu0 0
    %98 = vmatprep.subr.bf16.mxu0 0
    %99 = vmatpush1.bf16.msra.mxu0 0
    %100 = vmatprep.subr.bf16.mxu0 0
    %101 = vmatpush1.bf16.msra.mxu0 0
    %102 = vmatprep.subr.bf16.mxu0 0
    %103 = vmatpush1.bf16.msra.mxu0 0
    %104 = vmatprep.subr.bf16.mxu0 0
    %105 = vmatpush1.bf16.msra.mxu0 0
    %106 = vmatprep.mubr.bf16.mxu0 0
    %107 = vmatmul.mubr.bf16.gmra.mrb[0].mxu0 %v72
    %v108 = vpop.f32.mrb[0].mxu0
    %v109 = vadd.f32 0.0, %v108
    %v110 = vpop.f32.mrb[0].mxu0
    %v111 = vpop.f32.mrb[0].mxu0
    %v112 = vadd.f32 0.0, %v111
    %v113 = vpop.f32.mrb[0].mxu0
    %114 = vdwg.mxu0
    %v115 = vld [vmem:[%s1] sm:$0xff]
    %v116 = vld [vmem:[%s1 + $0x8] sm:$0xff]
    %v117 = vpack.c.bf16 %v116, %v115
    %v118 = vld [vmem:[%s3] sm:$0xf]
    %v119 = vld [vmem:[%s3 + $0x4] sm:$0xf]
    %v120 = vld [vmem:[%s3 + $0x8] sm:$0xf]
    %v121 = vld [vmem:[%s3 + $0xc] sm:$0xf]
    %v122 = vld [vmem:[%s3 + $0x10] sm:$0xf]
    %v123 = vld [vmem:[%s3 + $0x14] sm:$0xf]
    %v124 = vld [vmem:[%s3 + $0x18] sm:$0xf]
    %v125 = vld [vmem:[%s3 + $0x1c] sm:$0xf]
    %v126 = vld [vmem:[%s3 + $0x20] sm:$0xf]
    %v127 = vld [vmem:[%s3 + $0x24] sm:$0xf]
    %v128 = vld [vmem:[%s3 + $0x28] sm:$0xf]
    %v129 = vld [vmem:[%s3 + $0x2c] sm:$0xf]
    %v130 = vld [vmem:[%s3 + $0x30] sm:$0xf]
    %v131 = vld [vmem:[%s3 + $0x34] sm:$0xf]
    %v132 = vld [vmem:[%s3 + $0x38] sm:$0xf]
    %v133 = vld [vmem:[%s3 + $0x3c] sm:$0xf]
    %v150 = vunpack.c.l.b16 %v118
    %v151 = vunpack.c.l.b16 %v119
    %v152 = vunpack.c.l.b16 %v120
    %v153 = vunpack.c.l.b16 %v121
    %v154 = vunpack.c.l.b16 %v122
    %v155 = vunpack.c.l.b16 %v123
    %v156 = vunpack.c.l.b16 %v124
    %v157 = vunpack.c.l.b16 %v125
    %v158 = vunpack.c.l.b16 %v126
    %v159 = vunpack.c.l.b16 %v127
    %v160 = vunpack.c.l.b16 %v128
    %v161 = vunpack.c.l.b16 %v129
    %v162 = vunpack.c.l.b16 %v130
    %v163 = vunpack.c.l.b16 %v131
    %v164 = vunpack.c.l.b16 %v132
    %v165 = vunpack.c.l.b16 %v133
    %v166 = vpack.c.b16 %v151, %v150
    %v167 = vpack.c.b16 %v153, %v152
    %v168 = vpack.c.b16 %v155, %v154
    %v169 = vpack.c.b16 %v157, %v156
    %v170 = vpack.c.b16 %v159, %v158
    %v171 = vpack.c.b16 %v161, %v160
    %v172 = vpack.c.b16 %v163, %v162
    %v173 = vpack.c.b16 %v165, %v164
    %182 = vmatprep.subr.bf16.mxu0 0
    %183 = vmatpush1.bf16.msra.mxu0 %v166
    %184 = vmatprep.subr.bf16.mxu0 0
    %185 = vmatpush1.bf16.msra.mxu0 %v167
    %186 = vmatprep.subr.bf16.mxu0 0
    %187 = vmatpush1.bf16.msra.mxu0 %v168
    %188 = vmatprep.subr.bf16.mxu0 0
    %189 = vmatpush1.bf16.msra.mxu0 %v169
    %190 = vmatprep.subr.bf16.mxu0 0
    %191 = vmatpush1.bf16.msra.mxu0 %v170
    %192 = vmatprep.subr.bf16.mxu0 0
    %193 = vmatpush1.bf16.msra.mxu0 %v171
    %194 = vmatprep.subr.bf16.mxu0 0
    %195 = vmatpush1.bf16.msra.mxu0 %v172
    %196 = vmatprep.subr.bf16.mxu0 0
    %197 = vmatpush1.bf16.msra.mxu0 %v173
    %198 = vmatprep.subr.bf16.mxu0 0
    %199 = vmatpush1.bf16.msra.mxu0 0
    %200 = vmatprep.subr.bf16.mxu0 0
    %201 = vmatpush1.bf16.msra.mxu0 0
    %202 = vmatprep.subr.bf16.mxu0 0
    %203 = vmatpush1.bf16.msra.mxu0 0
    %204 = vmatprep.subr.bf16.mxu0 0
    %205 = vmatpush1.bf16.msra.mxu0 0
    %206 = vmatprep.subr.bf16.mxu0 0
    %207 = vmatpush1.bf16.msra.mxu0 0
    %208 = vmatprep.subr.bf16.mxu0 0
    %209 = vmatpush1.bf16.msra.mxu0 0
    %210 = vmatprep.subr.bf16.mxu0 0
    %211 = vmatpush1.bf16.msra.mxu0 0
    %212 = vmatprep.subr.bf16.mxu0 0
    %213 = vmatpush1.bf16.msra.mxu0 0
    %214 = vmatprep.mubr.bf16.mxu0 0
    %215 = vmatmul.mubr.bf16.gmra.mrb[0].mxu0 %v117
    %v216 = vpop.f32.mrb[0].mxu0
    %v217 = vadd.f32 0.0, %v216
    %v218 = vpop.f32.mrb[0].mxu0
    %v219 = vpop.f32.mrb[0].mxu0
    %v220 = vadd.f32 0.0, %v219
    %v221 = vpop.f32.mrb[0].mxu0
    %222 = vdwg.mxu0
    %225 = vrot.lane.b32.xlu0 %v217, 16
    %v226 = vpop.permute.xlu0 %225
    %227 = vrot.lane.b32.xlu0 %v220, 16
    %v228 = vpop.permute.xlu0 %227
    %vm231 = vcmask 130048
    %v232 = vsel %vm231, %v109, %v226
    %v233 = vsel %vm231, %v112, %v228
    %v234 = vld [vmem:[%s4] sm:$0x1]
    %v236 = vlaneseq
    %v237 = vshrl.u32 %v236, 7
    %v238 = vsub.s32 0, %v237
    %v239 = vrot.slane %v234, %v238
    %v241 = vmul.f32 %v232, %v239
    %v242 = vmul.f32 %v233, %v239
    %v243 = vld [vmem:[%s5] sm:$0x1]
    %v245 = vlaneseq
    %v246 = vshrl.u32 %v245, 7
    %v247 = vsub.s32 0, %v246
    %v248 = vrot.slane %v243, %v247
    %v250 = vadd.f32 %v241, %v248
    %v251 = vadd.f32 %v242, %v248
    %v252 = vmul.f32 %v250, %v250
    %v253 = vmul.f32 %v251, %v251
    %vm254 = vcmask 261120
    %v255 = vsel %vm254, %v252, 0.0
    %256 = vadd.xlane.f32.xlu0 %v255
    %v257 = vpop.xlane.xlu0 %256
    %v258 = vsel %vm254, %v253, 0.0
    %259 = vadd.xlane.f32.xlu0 %v258
    %v260 = vpop.xlane.xlu0 %259
    %v261 = vmax.f32 %v257, 1e-24
    %v262 = vmax.f32 %v260, 1e-24
    %v263 = vrsqrt.pop %v261
    %v264 = vrsqrt.pop %v262
    %v265 = vmul.f32 %v250, %v263
    %v266 = vmul.f32 %v251, %v264
    %267 = vst.msk [vmem:[#allocation4] sm:$0xff] %vm254, %v265
    %268 = vst.msk [vmem:[#allocation4 + $0x8] sm:$0xff] %vm254, %v266
    %v269 = vmul.f32 %v257, %v263
    %v270 = vmul.f32 %v260, %v264
    %s271 = sld [smem:[#allocation2]]
    %v272 = vstv %s271
    %v273 = vmul.f32 %v269, %v272
    %v274 = vmul.f32 %v270, %v272
    %s275 = sld [smem:[#allocation3]]
    %v276 = vstv %s275
    %v277 = vadd.f32 %v273, %v276
    %v278 = vadd.f32 %v274, %v276
    %vm279 = vcmask 7168
    %280 = vst.msk [vmem:[%s9] sm:$0xff] %vm279, %v277
    %281 = vst.msk [vmem:[%s9 + $0x8] sm:$0xff] %vm279, %v278
    // Predicated region
    $region34: #{tpu_custom_call.1} parent=1 // pred_check
      _
    $region35: #{tpu_custom_call.1} parent=1 // pred_check_branch
      %283 = sbr.rel (0) target = $region37
    $region36: #{tpu_custom_call.1} parent=1 // pred_region
      %s285 = ssub.s32 256, 256
      %286 = vsyncadd [#allocation5], %s285
      %s287 = sshll.u32 [#allocation4], 4
      %s288 = int_to_ptr.vmem [resolvable:$true] %s287
      %293 = dma.vmem_to_hbm [thread:$0]  %s288, 256, %s8, [#allocation5], 128, 128, 8
    $region37: #{tpu_custom_call.1} parent=1 // pred_fallthru
      _
    // Predicated region
    $region38: #{tpu_custom_call.1} parent=1 // pred_check
      _
    $region39: #{tpu_custom_call.1} parent=1 // pred_check_branch
      %295 = sbr.rel (0) target = $region41
    $region40: #{tpu_custom_call.1} parent=1 // pred_region
      _
    $region41: #{tpu_custom_call.1} parent=1 // pred_fallthru
      _
    // Predicated region
    $region42: #{tpu_custom_call.1} parent=1 // pred_check
      _
    $region43: #{tpu_custom_call.1} parent=1 // pred_check_branch
      %297 = sbr.rel (0) target = $region45
    $region44: #{tpu_custom_call.1} parent=1 // pred_region
      %298 = dma.done [#allocation5], 256
    $region45: #{tpu_custom_call.1} parent=1 // pred_fallthru
      _
    // Predicated region
    $region46: #{tpu_custom_call.1} parent=1 // pred_check
      _
    $region47: #{tpu_custom_call.1} parent=1 // pred_check_branch
      %300 = sbr.rel (0) target = $region49
    $region48: #{tpu_custom_call.1} parent=1 // pred_region
      _
    $region49: #{tpu_custom_call.1} parent=1 // pred_fallthru
      _
    %301 = vsyncpa [#allocation5], 1

// kernel: tpu_custom_call.1
$region0: #{tpu_custom_call.1}
  #allocation0 [shape = 'u32[]', space=smem, size = 0x4, offset = 0x4, fixed_abs, tag = 'smem constant byte address 0x4 - core index']
  #allocation1 [shape = 'u32[144,128]{1,0:T(1,128)}', space=vmem, size = 0x12000, scoped, tag = 'internal scratch']
  #allocation2 [shape = 'f32[1,1]{1,0:T(1,128)S(6)}', space=smem, size = 0x200, scoped, tag = 'scoped memory for tpu_custom_call.1']
  #allocation3 [shape = 'f32[1,1]{1,0:T(1,128)S(6)}', space=smem, size = 0x200, scoped, tag = 'scoped memory for tpu_custom_call.1']
  %s0 = inlined_call_operand.vmem [shape: f32[16,64], index: 0, kind: input, shape index: {}]
  %s1 = inlined_call_operand.vmem [shape: f32[16,128], index: 1, kind: input, shape index: {}]
  %s2 = inlined_call_operand.vmem [shape: bf16[64,16], index: 2, kind: input, shape index: {}]
  %s3 = inlined_call_operand.vmem [shape: bf16[128,16], index: 3, kind: input, shape index: {}]
  %s4 = inlined_call_operand.vmem [shape: f32[1,32], index: 4, kind: input, shape index: {}]
  %s5 = inlined_call_operand.vmem [shape: f32[1,32], index: 5, kind: input, shape index: {}]
  %s6 = inlined_call_operand.<no memory space> [shape: f32[1,1], index: 6, kind: input, shape index: {}]
  %s7 = inlined_call_operand.<no memory space> [shape: f32[1,1], index: 7, kind: input, shape index: {}]
  %s8 = inlined_call_operand.hbm [shape: f32[16,32], index: 8, kind: output, shape index: {0}]
  %s9 = inlined_call_operand.vmem [shape: f32[16,1], index: 9, kind: output, shape index: {1}]
  %10 = xla_tuple %s8, %s9
  %s11 = sld [smem:[#allocation0]]
  $region50: #{tpu_custom_call.1} parent=0
    _
  %s13 = ssub.s32 1, %s11
  %s14 = scalar_select 0, %s13, %s11
  %15 = sst [smem:[#allocation2]] %s6
  %16 = sst [smem:[#allocation3]] %s7
  $region1: #{tpu_custom_call.1} parent=0
    #allocation4 [shape = 'u8[8192]{0}', space=vmem, size = 0x2000, scoped, tag = 'output window, operand 0, single buffered']
    #allocation5 [shape = 's32[1]{0}', space=sflag, size = 0x4, scoped, tag = 'scoped memory for tpu_custom_call.1']
    %17 = vsyncpa [#allocation5], 0
    // Predicated region
    $region2: #{tpu_custom_call.1} parent=1 // pred_check
      _
    $region3: #{tpu_custom_call.1} parent=1 // pred_check_branch
      %19 = sbr.rel (0) target = $region5
    $region4: #{tpu_custom_call.1} parent=1 // pred_region
      _
    $region5: #{tpu_custom_call.1} parent=1 // pred_fallthru
      _
    // Predicated region
    $region6: #{tpu_custom_call.1} parent=1 // pred_check
      _
    $region7: #{tpu_custom_call.1} parent=1 // pred_check_branch
      %21 = sbr.rel (0) target = $region9
    $region8: #{tpu_custom_call.1} parent=1 // pred_region
      _
    $region9: #{tpu_custom_call.1} parent=1 // pred_fallthru
      _
    // Predicated region
    $region10: #{tpu_custom_call.1} parent=1 // pred_check
      _
    $region11: #{tpu_custom_call.1} parent=1 // pred_check_branch
      %23 = sbr.rel (0) target = $region13
    $region12: #{tpu_custom_call.1} parent=1 // pred_region
      _
    $region13: #{tpu_custom_call.1} parent=1 // pred_fallthru
      _
    // Predicated region
    $region14: #{tpu_custom_call.1} parent=1 // pred_check
      _
    $region15: #{tpu_custom_call.1} parent=1 // pred_check_branch
      %25 = sbr.rel (0) target = $region17
    $region16: #{tpu_custom_call.1} parent=1 // pred_region
      _
    $region17: #{tpu_custom_call.1} parent=1 // pred_fallthru
      _
    // Predicated region
    $region18: #{tpu_custom_call.1} parent=1 // pred_check
      _
    $region19: #{tpu_custom_call.1} parent=1 // pred_check_branch
      %27 = sbr.rel (0) target = $region21
    $region20: #{tpu_custom_call.1} parent=1 // pred_region
      _
    $region21: #{tpu_custom_call.1} parent=1 // pred_fallthru
      _
    // Predicated region
    $region22: #{tpu_custom_call.1} parent=1 // pred_check
      _
    $region23: #{tpu_custom_call.1} parent=1 // pred_check_branch
      %29 = sbr.rel (0) target = $region25
    $region24: #{tpu_custom_call.1} parent=1 // pred_region
      _
    $region25: #{tpu_custom_call.1} parent=1 // pred_fallthru
      _
    // Predicated region
    $region26: #{tpu_custom_call.1} parent=1 // pred_check
      _
    $region27: #{tpu_custom_call.1} parent=1 // pred_check_branch
      %31 = sbr.rel (0) target = $region29
    $region28: #{tpu_custom_call.1} parent=1 // pred_region
      _
    $region29: #{tpu_custom_call.1} parent=1 // pred_fallthru
      _
    // Predicated region
    $region30: #{tpu_custom_call.1} parent=1 // pred_check
      _
    $region31: #{tpu_custom_call.1} parent=1 // pred_check_branch
      %33 = sbr.rel (0) target = $region33
    $region32: #{tpu_custom_call.1} parent=1 // pred_region
      _
    $region33: #{tpu_custom_call.1} parent=1 // pred_fallthru
      _
    %v35 = vld [vmem:[%s0] sm:$0xff]
    %v36 = vld [vmem:[%s0 + $0x8] sm:$0xff]
    %v37 = vpack.c.bf16 %v36, %v35
    %v38 = vld [vmem:[%s2] sm:$0xf]
    %v39 = vld [vmem:[%s2 + $0x4] sm:$0xf]
    %v40 = vld [vmem:[%s2 + $0x8] sm:$0xf]
    %v41 = vld [vmem:[%s2 + $0xc] sm:$0xf]
    %v42 = vld [vmem:[%s2 + $0x10] sm:$0xf]
    %v43 = vld [vmem:[%s2 + $0x14] sm:$0xf]
    %v44 = vld [vmem:[%s2 + $0x18] sm:$0xf]
    %v45 = vld [vmem:[%s2 + $0x1c] sm:$0xf]
    %v54 = vunpack.c.l.b16 %v38
    %v55 = vunpack.c.l.b16 %v39
    %v56 = vunpack.c.l.b16 %v40
    %v57 = vunpack.c.l.b16 %v41
    %v58 = vunpack.c.l.b16 %v42
    %v59 = vunpack.c.l.b16 %v43
    %v60 = vunpack.c.l.b16 %v44
    %v61 = vunpack.c.l.b16 %v45
    %v62 = vpack.c.b16 %v55, %v54
    %v63 = vpack.c.b16 %v57, %v56
    %v64 = vpack.c.b16 %v59, %v58
    %v65 = vpack.c.b16 %v61, %v60
    %vm70 = vcmask 523264
    %v72 = vsel %vm70, %v37, 0
    %74 = vmatprep.subr.bf16.mxu0 0
    %75 = vmatpush1.bf16.msra.mxu0 %v62
    %76 = vmatprep.subr.bf16.mxu0 0
    %77 = vmatpush1.bf16.msra.mxu0 %v63
    %78 = vmatprep.subr.bf16.mxu0 0
    %79 = vmatpush1.bf16.msra.mxu0 %v64
    %80 = vmatprep.subr.bf16.mxu0 0
    %81 = vmatpush1.bf16.msra.mxu0 %v65
    %82 = vmatprep.subr.bf16.mxu0 0
    %83 = vmatpush1.bf16.msra.mxu0 0
    %84 = vmatprep.subr.bf16.mxu0 0
    %85 = vmatpush1.bf16.msra.mxu0 0
    %86 = vmatprep.subr.bf16.mxu0 0
    %87 = vmatpush1.bf16.msra.mxu0 0
    %88 = vmatprep.subr.bf16.mxu0 0
    %89 = vmatpush1.bf16.msra.mxu0 0
    %90 = vmatprep.subr.bf16.mxu0 0
    %91 = vmatpush1.bf16.msra.mxu0 0
    %92 = vmatprep.subr.bf16.mxu0 0
    %93 = vmatpush1.bf16.msra.mxu0 0
    %94 = vmatprep.subr.bf16.mxu0 0
    %95 = vmatpush1.bf16.msra.mxu0 0
    %96 = vmatprep.subr.bf16.mxu0 0
    %97 = vmatpush1.bf16.msra.mxu0 0
    %98 = vmatprep.subr.bf16.mxu0 0
    %99 = vmatpush1.bf16.msra.mxu0 0
    %100 = vmatprep.subr.bf16.mxu0 0
    %101 = vmatpush1.bf16.msra.mxu0 0
    %102 = vmatprep.subr.bf16.mxu0 0
    %103 = vmatpush1.bf16.msra.mxu0 0
    %104 = vmatprep.subr.bf16.mxu0 0
    %105 = vmatpush1.bf16.msra.mxu0 0
    %106 = vmatprep.mubr.bf16.mxu0 0
    %107 = vmatmul.mubr.bf16.gmra.mrb[0].mxu0 %v72
    %v108 = vpop.f32.mrb[0].mxu0
    %v109 = vadd.f32 0.0, %v108
    %v110 = vpop.f32.mrb[0].mxu0
    %v111 = vpop.f32.mrb[0].mxu0
    %v112 = vadd.f32 0.0, %v111
    %v113 = vpop.f32.mrb[0].mxu0
    %114 = vdwg.mxu0
    %v115 = vld [vmem:[%s1] sm:$0xff]
    %v116 = vld [vmem:[%s1 + $0x8] sm:$0xff]
    %v117 = vpack.c.bf16 %v116, %v115
    %v118 = vld [vmem:[%s3] sm:$0xf]
    %v119 = vld [vmem:[%s3 + $0x4] sm:$0xf]
    %v120 = vld [vmem:[%s3 + $0x8] sm:$0xf]
    %v121 = vld [vmem:[%s3 + $0xc] sm:$0xf]
    %v122 = vld [vmem:[%s3 + $0x10] sm:$0xf]
    %v123 = vld [vmem:[%s3 + $0x14] sm:$0xf]
    %v124 = vld [vmem:[%s3 + $0x18] sm:$0xf]
    %v125 = vld [vmem:[%s3 + $0x1c] sm:$0xf]
    %v126 = vld [vmem:[%s3 + $0x20] sm:$0xf]
    %v127 = vld [vmem:[%s3 + $0x24] sm:$0xf]
    %v128 = vld [vmem:[%s3 + $0x28] sm:$0xf]
    %v129 = vld [vmem:[%s3 + $0x2c] sm:$0xf]
    %v130 = vld [vmem:[%s3 + $0x30] sm:$0xf]
    %v131 = vld [vmem:[%s3 + $0x34] sm:$0xf]
    %v132 = vld [vmem:[%s3 + $0x38] sm:$0xf]
    %v133 = vld [vmem:[%s3 + $0x3c] sm:$0xf]
    %v150 = vunpack.c.l.b16 %v118
    %v151 = vunpack.c.l.b16 %v119
    %v152 = vunpack.c.l.b16 %v120
    %v153 = vunpack.c.l.b16 %v121
    %v154 = vunpack.c.l.b16 %v122
    %v155 = vunpack.c.l.b16 %v123
    %v156 = vunpack.c.l.b16 %v124
    %v157 = vunpack.c.l.b16 %v125
    %v158 = vunpack.c.l.b16 %v126
    %v159 = vunpack.c.l.b16 %v127
    %v160 = vunpack.c.l.b16 %v128
    %v161 = vunpack.c.l.b16 %v129
    %v162 = vunpack.c.l.b16 %v130
    %v163 = vunpack.c.l.b16 %v131
    %v164 = vunpack.c.l.b16 %v132
    %v165 = vunpack.c.l.b16 %v133
    %v166 = vpack.c.b16 %v151, %v150
    %v167 = vpack.c.b16 %v153, %v152
    %v168 = vpack.c.b16 %v155, %v154
    %v169 = vpack.c.b16 %v157, %v156
    %v170 = vpack.c.b16 %v159, %v158
    %v171 = vpack.c.b16 %v161, %v160
    %v172 = vpack.c.b16 %v163, %v162
    %v173 = vpack.c.b16 %v165, %v164
    %182 = vmatprep.subr.bf16.mxu0 0
    %183 = vmatpush1.bf16.msra.mxu0 %v166
    %184 = vmatprep.subr.bf16.mxu0 0
    %185 = vmatpush1.bf16.msra.mxu0 %v167
    %186 = vmatprep.subr.bf16.mxu0 0
    %187 = vmatpush1.bf16.msra.mxu0 %v168
    %188 = vmatprep.subr.bf16.mxu0 0
    %189 = vmatpush1.bf16.msra.mxu0 %v169
    %190 = vmatprep.subr.bf16.mxu0 0
    %191 = vmatpush1.bf16.msra.mxu0 %v170
    %192 = vmatprep.subr.bf16.mxu0 0
    %193 = vmatpush1.bf16.msra.mxu0 %v171
    %194 = vmatprep.subr.bf16.mxu0 0
    %195 = vmatpush1.bf16.msra.mxu0 %v172
    %196 = vmatprep.subr.bf16.mxu0 0
    %197 = vmatpush1.bf16.msra.mxu0 %v173
    %198 = vmatprep.subr.bf16.mxu0 0
    %199 = vmatpush1.bf16.msra.mxu0 0
    %200 = vmatprep.subr.bf16.mxu0 0
    %201 = vmatpush1.bf16.msra.mxu0 0
    %202 = vmatprep.subr.bf16.mxu0 0
    %203 = vmatpush1.bf16.msra.mxu0 0
    %204 = vmatprep.subr.bf16.mxu0 0
    %205 = vmatpush1.bf16.msra.mxu0 0
    %206 = vmatprep.subr.bf16.mxu0 0
    %207 = vmatpush1.bf16.msra.mxu0 0
    %208 = vmatprep.subr.bf16.mxu0 0
    %209 = vmatpush1.bf16.msra.mxu0 0
    %210 = vmatprep.subr.bf16.mxu0 0
    %211 = vmatpush1.bf16.msra.mxu0 0
    %212 = vmatprep.subr.bf16.mxu0 0
    %213 = vmatpush1.bf16.msra.mxu0 0
    %214 = vmatprep.mubr.bf16.mxu0 0
    %215 = vmatmul.mubr.bf16.gmra.mrb[0].mxu0 %v117
    %v216 = vpop.f32.mrb[0].mxu0
    %v217 = vadd.f32 0.0, %v216
    %v218 = vpop.f32.mrb[0].mxu0
    %v219 = vpop.f32.mrb[0].mxu0
    %v220 = vadd.f32 0.0, %v219
    %v221 = vpop.f32.mrb[0].mxu0
    %222 = vdwg.mxu0
    %225 = vrot.lane.b32.xlu0 %v217, 16
    %v226 = vpop.permute.xlu0 %225
    %227 = vrot.lane.b32.xlu0 %v220, 16
    %v228 = vpop.permute.xlu0 %227
    %vm231 = vcmask 130048
    %v232 = vsel %vm231, %v109, %v226
    %v233 = vsel %vm231, %v112, %v228
    %v234 = vld [vmem:[%s4] sm:$0x1]
    %v236 = vlaneseq
    %v237 = vshrl.u32 %v236, 7
    %v238 = vsub.s32 0, %v237
    %v239 = vrot.slane %v234, %v238
    %v241 = vmul.f32 %v232, %v239
    %v242 = vmul.f32 %v233, %v239
    %v243 = vld [vmem:[%s5] sm:$0x1]
    %v245 = vlaneseq
    %v246 = vshrl.u32 %v245, 7
    %v247 = vsub.s32 0, %v246
    %v248 = vrot.slane %v243, %v247
    %v250 = vadd.f32 %v241, %v248
    %v251 = vadd.f32 %v242, %v248
    %v252 = vmul.f32 %v250, %v250
    %v253 = vmul.f32 %v251, %v251
    %vm254 = vcmask 261120
    %v255 = vsel %vm254, %v252, 0.0
    %256 = vadd.xlane.f32.xlu0 %v255
    %v257 = vpop.xlane.xlu0 %256
    %v258 = vsel %vm254, %v253, 0.0
    %259 = vadd.xlane.f32.xlu0 %v258
    %v260 = vpop.xlane.xlu0 %259
    %v261 = vmax.f32 %v257, 1e-24
    %v262 = vmax.f32 %v260, 1e-24
    %v263 = vrsqrt.pop %v261
    %v264 = vrsqrt.pop %v262
    %v265 = vmul.f32 %v250, %v263
    %v266 = vmul.f32 %v251, %v264
    %267 = vst.msk [vmem:[#allocation4] sm:$0xff] %vm254, %v265
    %268 = vst.msk [vmem:[#allocation4 + $0x8] sm:$0xff] %vm254, %v266
    %v269 = vmul.f32 %v257, %v263
    %v270 = vmul.f32 %v260, %v264
    %s271 = sld [smem:[#allocation2]]
    %v272 = vstv %s271
    %v273 = vmul.f32 %v269, %v272
    %v274 = vmul.f32 %v270, %v272
    %s275 = sld [smem:[#allocation3]]
    %v276 = vstv %s275
    %v277 = vadd.f32 %v273, %v276
    %v278 = vadd.f32 %v274, %v276
    %vm279 = vcmask 7168
    %280 = vst.msk [vmem:[%s9] sm:$0xff] %vm279, %v277
    %281 = vst.msk [vmem:[%s9 + $0x8] sm:$0xff] %vm279, %v278
    // Predicated region
    $region34: #{tpu_custom_call.1} parent=1 // pred_check
      _
    $region35: #{tpu_custom_call.1} parent=1 // pred_check_branch
      %283 = sbr.rel (0) target = $region37
    $region36: #{tpu_custom_call.1} parent=1 // pred_region
      %s285 = ssub.s32 256, 256
      %286 = vsyncadd [#allocation5], %s285
      %s287 = sshll.u32 [#allocation4], 4
      %s288 = int_to_ptr.vmem [resolvable:$true] %s287
      %293 = dma.vmem_to_hbm [thread:$0]  %s288, 256, %s8, [#allocation5], 128, 128, 8
    $region37: #{tpu_custom_call.1} parent=1 // pred_fallthru
      _
    // Predicated region
    $region38: #{tpu_custom_call.1} parent=1 // pred_check
      _
    $region39: #{tpu_custom_call.1} parent=1 // pred_check_branch
      %295 = sbr.rel (0) target = $region41
    $region40: #{tpu_custom_call.1} parent=1 // pred_region
      _
    $region41: #{tpu_custom_call.1} parent=1 // pred_fallthru
      _
    // Predicated region
    $region42: #{tpu_custom_call.1} parent=1 // pred_check
      _
    $region43: #{tpu_custom_call.1} parent=1 // pred_check_branch
      %297 = sbr.rel (0) target = $region45
    $region44: #{tpu_custom_call.1} parent=1 // pred_region
      %298 = dma.done [#allocation5], 256
    $region45: #{tpu_custom_call.1} parent=1 // pred_fallthru
      _
    // Predicated region
    $region46: #{tpu_custom_call.1} parent=1 // pred_check
      _
    $region47: #{tpu_custom_call.1} parent=1 // pred_check_branch
      %300 = sbr.rel (0) target = $region49
    $region48: #{tpu_custom_call.1} parent=1 // pred_region
      _
    $region49: #{tpu_custom_call.1} parent=1 // pred_fallthru
      _
    %301 = vsyncpa [#allocation5], 1

</llo_original>
